<compile_context>
chip_gen: v6e
topology: v6e:2x2x1
jax: 0.10.0
libtpu: 0.0.40
codegen_flags: <defaults>
</compile_context>

<pallas_src>
import jax
import jax.numpy as jnp
from jax.experimental import pallas as pl
from jax.experimental.pallas import tpu as pltpu


def _round_up(x, m):
    return ((x + m - 1) // m) * m


# -----------------------------------------------------------------------------
# Kernels
# -----------------------------------------------------------------------------
def _fc0_single_k_kernel(x_ref, w_ref, b_ref, o_ref):
    # Single K block: no accumulator scratch, no init/finalize phases.
    # Cast x to the weight dtype (bf16 by default) in-register so the MXU is
    # fed natively; the cast overlaps the next tiles' DMAs and avoids an extra
    # wrapper-side HBM pass over the activation.
    x = x_ref[...].astype(w_ref.dtype)
    acc = jnp.dot(x, w_ref[...], preferred_element_type=jnp.float32)
    o_ref[...] = (acc + b_ref[...]).astype(o_ref.dtype)


def _fc0_split_k_kernel(x_ref, w_ref, b_ref, o_ref, acc_ref):
    # grid = (j over N tiles, i over M tiles, k over K tiles); K is the last
    # (reduction) axis so the output/accumulator block is stationary across it.
    k = pl.program_id(2)

    @pl.when(k == 0)
    def _():
        acc_ref[...] = jnp.zeros_like(acc_ref)

    x = x_ref[...].astype(w_ref.dtype)
    acc_ref[...] += jnp.dot(x, w_ref[...], preferred_element_type=jnp.float32)

    @pl.when(k == pl.num_programs(2) - 1)
    def _():
        # Bias add + output cast ride the write-out epilogue (one VPU pass).
        o_ref[...] = (acc_ref[...] + b_ref[...]).astype(o_ref.dtype)


# -----------------------------------------------------------------------------
# pallas_call wrappers
# -----------------------------------------------------------------------------
_VMEM_LIMIT_BYTES = 48 * 1024 * 1024  # per perf review: safe on v5e/v6e/v7x


def _fc0_call_single_k(x, w_t, b_row, out_dtype, tm, tn):
    M, K = x.shape
    _, N = w_t.shape
    grid = (pl.cdiv(N, tn), pl.cdiv(M, tm))  # j outer, i inner: w resident

    return pl.pallas_call(
        _fc0_single_k_kernel,
        out_shape=jax.ShapeDtypeStruct((M, N), out_dtype),
        grid_spec=pltpu.PrefetchScalarGridSpec(
            num_scalar_prefetch=0,
            grid=grid,
            in_specs=[
                pl.BlockSpec((tm, K), lambda j, i: (i, 0)),
                # Weight block index depends only on j: the K-column stays
                # VMEM-resident across the whole inner M sweep.
                pl.BlockSpec((K, tn), lambda j, i: (0, j)),
                pl.BlockSpec((1, tn), lambda j, i: (0, j)),
            ],
            out_specs=pl.BlockSpec((tm, tn), lambda j, i: (i, j)),
        ),
        compiler_params=pltpu.CompilerParams(
            dimension_semantics=("parallel", "parallel"),
            vmem_limit_bytes=_VMEM_LIMIT_BYTES,
        ),
    )(x, w_t, b_row)


def _fc0_call_split_k(x, w_t, b_row, out_dtype, tm, tn, tk):
    M, K = x.shape
    _, N = w_t.shape
    assert K % tk == 0  # reduction axis must tile exactly (zero-padded if not)
    grid = (pl.cdiv(N, tn), pl.cdiv(M, tm), K // tk)

    return pl.pallas_call(
        _fc0_split_k_kernel,
        out_shape=jax.ShapeDtypeStruct((M, N), out_dtype),
        grid_spec=pltpu.PrefetchScalarGridSpec(
            num_scalar_prefetch=0,
            grid=grid,
            in_specs=[
                pl.BlockSpec((tm, tk), lambda j, i, k: (i, k)),
                pl.BlockSpec((tk, tn), lambda j, i, k: (k, j)),
                pl.BlockSpec((1, tn), lambda j, i, k: (0, j)),
            ],
            out_specs=pl.BlockSpec((tm, tn), lambda j, i, k: (i, j)),
            scratch_shapes=[pltpu.VMEM((tm, tn), jnp.float32)],
        ),
        compiler_params=pltpu.CompilerParams(
            dimension_semantics=("parallel", "parallel", "arbitrary"),
            vmem_limit_bytes=_VMEM_LIMIT_BYTES,
        ),
    )(x, w_t, b_row)


# -----------------------------------------------------------------------------
# Dispatch
# -----------------------------------------------------------------------------
def pcf_fc0_prepacked(x, w_t, b_row, *, out_dtype=None, force_pallas=False,
                      tm=256, tn=512, max_tk=2048,
                      vmem_budget=24 * 1024 * 1024):
    """y = x @ w_t + b with w_t already transposed to [D_in, D_out] (cached)."""
    M, K = x.shape
    K_w, N = w_t.shape
    assert K == K_w and b_row.shape == (1, N)
    if out_dtype is None:
        out_dtype = x.dtype
    b_row = b_row.astype(jnp.float32)

    # Tiny problems: a pallas_call launch is pure overhead -> plain XLA dot.
    if not force_pallas and (M * K * N) < (128 * 128 * 128):
        y = jnp.dot(x.astype(w_t.dtype), w_t,
                    preferred_element_type=jnp.float32) + b_row
        return y.astype(out_dtype)

    x_bytes = jnp.dtype(x.dtype).itemsize
    w_bytes = jnp.dtype(w_t.dtype).itemsize
    o_bytes = jnp.dtype(out_dtype).itemsize

    # dtype-aware sublane clamp (8 rows f32, 16 bf16, 32 int8/fp8 inputs).
    sub = max(8, 32 // max(1, x_bytes))
    tm = min(tm, _round_up(M, sub))
    tn = min(tn, _round_up(N, 128))

    # Single-K fast path: whole K column per tile (no accumulator, no k axis,
    # no K padding — block K dim equals the full array dim so it is legal even
    # when D_in is not 128-aligned).  Estimate double-buffered working set.
    single_bytes = (2 * (tm * K * x_bytes + K * tn * w_bytes)
                    + 2 * tm * tn * o_bytes + 2 * tn * 4)
    if single_bytes <= vmem_budget:
        return _fc0_call_single_k(x, w_t, b_row, out_dtype, tm, tn)

    # Split-K fallback: pick the largest 128-multiple tk (<= max_tk) that
    # divides the 128-aligned K; only pad K when it is not already aligned
    # (zero padding along K is exact).
    K_pad = _round_up(K, 128)
    tk = max(128, (min(max_tk, K_pad) // 128) * 128)
    while K_pad % tk:
        tk -= 128
    if K_pad != K:
        # TODO(synk): rare path (huge, non-128-aligned D_in) pays one pad pass.
        x = jnp.pad(x, ((0, 0), (0, K_pad - K)))
        w_t = jnp.pad(w_t, ((0, K_pad - K), (0, 0)))
    return _fc0_call_split_k(x, w_t, b_row, out_dtype, tm, tn, tk)


def pcf_fc0(x, w, b, *, compute_dtype=jnp.bfloat16, out_dtype=None, **kwargs):
    """y = x @ W^T + b (nn.Linear semantics) via the Pallas TPU kernel.

    One-off convenience path: transposes/casts the weight per call.  Prefer
    the PcfNet class, which caches the packed weight once.
    x: [B, D_in], w: [D_out, D_in] (nn.Linear.weight layout), b: [D_out].
    """
    D_out, D_in = w.shape
    assert x.shape[-1] == D_in and b.shape == (D_out,)
    w_t = w.T.astype(compute_dtype)            # [D_in, D_out], MXU-ready
    b_row = b.astype(jnp.float32).reshape(1, D_out)
    if out_dtype is None:
        out_dtype = x.dtype
    return pcf_fc0_prepacked(x, w_t, b_row, out_dtype=out_dtype, **kwargs)


class PcfNet:
    """JAX/Pallas port of the PyTorch PcfNet module."""

    def __init__(self, W_cf_weight, W_cf_bias, compute_dtype=jnp.bfloat16):
        # self.fc0 = W_cf  (a linear map); stored here as (weight, bias).
        self.fc0_weight = jnp.asarray(W_cf_weight)   # [D_out, D_in]
        self.fc0_bias = jnp.asarray(W_cf_bias)       # [D_out]
        # Weights are static: transpose + cast ONCE so apply_fc0 pays no
        # per-call weight HBM passes (perf-review item).
        self._w_t = self.fc0_weight.T.astype(compute_dtype)        # [D_in, D_out]
        self._b_row = self.fc0_bias.astype(jnp.float32).reshape(1, -1)

    def forward(self):
        # Reference forward is `pass` -> returns None.  Semantics preserved.
        return None

    def apply_fc0(self, x, **kwargs):
        # The implied compute of the module (Pallas kernel hot path).
        return pcf_fc0_prepacked(x, self._w_t, self._b_row,
                                 out_dtype=x.dtype, **kwargs)


if __name__ == "__main__":
    key = jax.random.PRNGKey(0)
    k_x, k_w, k_b, k_x2, k_w2, k_b2 = jax.random.split(key, 6)

    # --- 1) Module-consistent tiny shapes (batch=8, hidden=32). -------------
    # Force the Pallas path (default dispatch would route this to jnp.dot) and
    # use f32 compute so the check against the f32 reference is tight.
    B, D_in, D_out = 8, 32, 32
    x = jax.random.normal(k_x, (B, D_in), dtype=jnp.float32)
    W_cf = jax.random.normal(k_w, (D_out, D_in), dtype=jnp.float32) * 0.1
    b_cf = jax.random.normal(k_b, (D_out,), dtype=jnp.float32) * 0.1

    net = PcfNet(W_cf, b_cf)
    assert net.forward() is None  # reference forward() is a no-op

    y = jax.block_until_ready(
        pcf_fc0(x, W_cf, b_cf, compute_dtype=jnp.float32, force_pallas=True))
    y_ref = x @ W_cf.T + b_cf
    assert y.shape == (B, D_out)
    assert jnp.allclose(y, y_ref, atol=1e-3, rtol=1e-3)

    # --- 2) Larger shape: default bf16 compute via the class (cached packed
    # weight), single-K fast path, ragged M/N edges (272 vs 256/384 tiles). ---
    B2, D_in2, D_out2 = 272, 384, 272
    x2 = jax.random.normal(k_x2, (B2, D_in2), dtype=jnp.float32)
    W2 = jax.random.normal(k_w2, (D_out2, D_in2), dtype=jnp.float32) * 0.05
    b2 = jax.random.normal(k_b2, (D_out2,), dtype=jnp.float32) * 0.05

    net2 = PcfNet(W2, b2)  # caches W2.T as bf16 once
    y2 = jax.block_until_ready(net2.apply_fc0(x2, force_pallas=True))
    xq = x2.astype(jnp.bfloat16).astype(jnp.float32)
    wq = W2.T.astype(jnp.bfloat16).astype(jnp.float32)
    y2_ref = xq @ wq + b2
    assert y2.shape == (B2, D_out2)
    assert y2.dtype == x2.dtype
    assert jnp.allclose(y2, y2_ref, atol=2e-3, rtol=2e-3)

    # --- 3) Split-K accumulator path (forced via tiny VMEM budget / tk=128),
    # f32 compute, ragged 128-tiles on M and N, 3-step K reduction. ----------
    y3 = jax.block_until_ready(
        pcf_fc0(x2, W2, b2, compute_dtype=jnp.float32, force_pallas=True,
                tm=128, tn=128, max_tk=128, vmem_budget=0))
    y3_ref = x2 @ W2.T + b2
    assert y3.shape == (B2, D_out2)
    assert jnp.allclose(y3, y3_ref, atol=1e-3, rtol=1e-3)

    print("KERNEL_OK")
</pallas_src>

<mosaic_0001>
module attributes {stable_mosaic.version = 11 : i64} {
  func.func @_fc0_single_k_kernel(%arg0: i32, %arg1: i32, %arg2: memref<8x32xf32, #tpu.memory_space<vmem>>, %arg3: memref<32x128xf32, #tpu.memory_space<vmem>>, %arg4: memref<1x128xf32, #tpu.memory_space<vmem>>, %arg5: memref<8x128xf32, #tpu.memory_space<vmem>>) attributes {dimension_semantics = [#tpu.dimension_semantics<parallel>, #tpu.dimension_semantics<parallel>], iteration_bounds = array<i64: 1, 1>, scalar_prefetch = 0 : i64, scratch_operands = 0 : i64, tpu.core_type = #tpu.core_type<tc>, window_params = [{transform_indices = @transform_0, window_bounds = array<i64: 8, 32>}, {transform_indices = @transform_1, window_bounds = array<i64: 32, 128>}, {transform_indices = @transform_2, window_bounds = array<i64: 1, 128>}, {transform_indices = @transform_3, window_bounds = array<i64: 8, 128>}]} {
    %c0 = arith.constant 0 : index
    %c0_0 = arith.constant 0 : index
    %0 = vector.load %arg2[%c0, %c0_0] : memref<8x32xf32, #tpu.memory_space<vmem>>, vector<8x32xf32>
    %c0_1 = arith.constant 0 : index
    %c0_2 = arith.constant 0 : index
    %1 = vector.load %arg3[%c0_1, %c0_2] : memref<32x128xf32, #tpu.memory_space<vmem>>, vector<32x128xf32>
    %cst = arith.constant dense<0.000000e+00> : vector<8x128xf32>
    %2 = tpu.matmul %0, %1, %cst {dimension_numbers = #tpu.dot_dimension_numbers<[1], [0], [0], [1], [0, 0, 1, 1], [], []>} : vector<8x32xf32>, vector<32x128xf32>, vector<8x128xf32> -> vector<8x128xf32>
    %c0_3 = arith.constant 0 : index
    %c0_4 = arith.constant 0 : index
    %3 = vector.load %arg4[%c0_3, %c0_4] : memref<1x128xf32, #tpu.memory_space<vmem>>, vector<1x128xf32>
    %4 = vector.broadcast %3 : vector<1x128xf32> to vector<8x128xf32>
    %5 = arith.addf %2, %4 : vector<8x128xf32>
    %c0_5 = arith.constant 0 : index
    %c0_6 = arith.constant 0 : index
    %6 = vector.load %arg5[%c0_5, %c0_6] : memref<8x128xf32, #tpu.memory_space<vmem>>, vector<8x128xf32>
    tpu.vector_store %arg5[%c0_5, %c0_6], %5 {strides = array<i32>} : memref<8x128xf32, #tpu.memory_space<vmem>>, vector<8x128xf32>,
    return
  }
  func.func @transform_0(%arg0: i32, %arg1: i32) -> (i32, i32) {
    %c0_i32 = arith.constant 0 : i32
    %c0_i32_0 = arith.constant 0 : i32
    return %arg1, %c0_i32 : i32, i32
  }
  func.func @transform_1(%arg0: i32, %arg1: i32) -> (i32, i32) {
    %c0_i32 = arith.constant 0 : i32
    %c0_i32_0 = arith.constant 0 : i32
    return %c0_i32, %arg0 : i32, i32
  }
  func.func @transform_2(%arg0: i32, %arg1: i32) -> (i32, i32) {
    %c0_i32 = arith.constant 0 : i32
    %c0_i32_0 = arith.constant 0 : i32
    return %c0_i32, %arg0 : i32, i32
  }
  func.func @transform_3(%arg0: i32, %arg1: i32) -> (i32, i32) {
    %c0_i32 = arith.constant 0 : i32
    return %arg1, %arg0 : i32, i32
  }
}

</mosaic_0001>

<llo_original>
// kernel: tpu_custom_call.1
$region0: #{tpu_custom_call.1}
  #allocation0 [shape = 'u32[]', space=smem, size = 0x4, offset = 0x4, fixed_abs, tag = 'smem constant byte address 0x4 - core index']
  #allocation1 [shape = 'u32[144,128]{1,0:T(1,128)}', space=vmem, size = 0x12000, scoped, tag = 'internal scratch']
  %s0 = inlined_call_operand.hbm [shape: f32[8,32], index: 0, kind: input, shape index: {}]
  %s1 = inlined_call_operand.hbm [shape: f32[32,32], index: 1, kind: input, shape index: {}]
  %s2 = inlined_call_operand.vmem [shape: f32[1,32], index: 2, kind: input, shape index: {}]
  %s3 = inlined_call_operand.hbm [shape: f32[8,32], index: 3, kind: output, shape index: {}]
  %s4 = sld [smem:[#allocation0]]
  $region30: #{tpu_custom_call.1} parent=0
    _
  %s6 = ssub.s32 1, %s4
  %s7 = scalar_select 0, %s6, %s4
  $region1: #{tpu_custom_call.1} parent=0
    #allocation2 [shape = 'u8[4096]{0}', space=vmem, size = 0x1000, scoped, tag = 'input window, operand 0, single buffered']
    #allocation3 [shape = 's32[1]{0}', space=sflag, size = 0x4, scoped, tag = 'scoped memory for tpu_custom_call.1']
    #allocation4 [shape = 's32[1]{0}', space=sflag, size = 0x4, scoped, tag = 'scoped memory for tpu_custom_call.1']
    #allocation5 [shape = 'u8[16384]{0}', space=vmem, size = 0x4000, scoped, tag = 'input window, operand 1, single buffered']
    #allocation6 [shape = 's32[1]{0}', space=sflag, size = 0x4, scoped, tag = 'scoped memory for tpu_custom_call.1']
    #allocation7 [shape = 'u8[4096]{0}', space=vmem, size = 0x1000, scoped, tag = 'output window, operand 0, single buffered']
    %8 = vsyncpa [#allocation3], 0
    %9 = vsyncpa [#allocation6], 0
    %10 = vsyncpa [#allocation4], 0
    // Predicated region
    $region2: #{tpu_custom_call.1} parent=1 // pred_check
      _
    $region3: #{tpu_custom_call.1} parent=1 // pred_check_branch
      %12 = sbr.rel (0) target = $region5
    $region4: #{tpu_custom_call.1} parent=1 // pred_region
      %s14 = ssub.s32 128, 128
      %15 = vsyncadd [#allocation3], %s14
      %s17 = sshll.u32 [#allocation2], 4
      %s18 = int_to_ptr.vmem [resolvable:$true] %s17
      %20 = dma.hbm_to_vmem [thread:$0]  %s0, 128, %s18, [#allocation3]
    $region5: #{tpu_custom_call.1} parent=1 // pred_fallthru
      _
    // Predicated region
    $region6: #{tpu_custom_call.1} parent=1 // pred_check
      _
    $region7: #{tpu_custom_call.1} parent=1 // pred_check_branch
      %22 = sbr.rel (0) target = $region9
    $region8: #{tpu_custom_call.1} parent=1 // pred_region
      %s24 = ssub.s32 512, 512
      %25 = vsyncadd [#allocation6], %s24
      %s26 = sshll.u32 [#allocation5], 4
      %s27 = int_to_ptr.vmem [resolvable:$true] %s26
      %32 = dma.hbm_to_vmem [thread:$0]  %s1, 512, %s27, [#allocation6], 128, 128, 8
    $region9: #{tpu_custom_call.1} parent=1 // pred_fallthru
      _
    // Predicated region
    $region10: #{tpu_custom_call.1} parent=1 // pred_check
      _
    $region11: #{tpu_custom_call.1} parent=1 // pred_check_branch
      %34 = sbr.rel (0) target = $region13
    $region12: #{tpu_custom_call.1} parent=1 // pred_region
      _
    $region13: #{tpu_custom_call.1} parent=1 // pred_fallthru
      _
    // Predicated region
    $region14: #{tpu_custom_call.1} parent=1 // pred_check
      _
    $region15: #{tpu_custom_call.1} parent=1 // pred_check_branch
      %36 = sbr.rel (0) target = $region17
    $region16: #{tpu_custom_call.1} parent=1 // pred_region
      %37 = dma.done [#allocation3], 128
    $region17: #{tpu_custom_call.1} parent=1 // pred_fallthru
      _
    // Predicated region
    $region18: #{tpu_custom_call.1} parent=1 // pred_check
      _
    $region19: #{tpu_custom_call.1} parent=1 // pred_check_branch
      %39 = sbr.rel (0) target = $region21
    $region20: #{tpu_custom_call.1} parent=1 // pred_region
      %40 = dma.done [#allocation6], 512
    $region21: #{tpu_custom_call.1} parent=1 // pred_fallthru
      _
    %v41 = vld [vmem:[#allocation2] sm:$0xff]
    %v42 = vld [vmem:[#allocation5] sm:$0xff]
    %v43 = vld [vmem:[#allocation5 + $0x8] sm:$0xff]
    %v44 = vld [vmem:[#allocation5 + $0x10] sm:$0xff]
    %v45 = vld [vmem:[#allocation5 + $0x18] sm:$0xff]
    %v46 = vld [vmem:[%s2] sm:$0x1]
    %v48 = vlaneseq
    %v49 = vshrl.u32 %v48, 7
    %v50 = vsub.s32 0, %v49
    %v51 = vrot.slane %v46, %v50
    %vm53 = vcmask 261120
    %v55 = vsel %vm53, %v41, 0
    %57 = vmatprep.subr.mxu0 0.0
    %58 = vmatpush1.msra.mxu0 0.0
    %59 = vmatprep.subr.mxu0 0.0
    %60 = vmatpush1.msra.mxu0 0.0
    %61 = vmatprep.subr.mxu0 0.0
    %62 = vmatpush1.msra.mxu0 0.0
    %63 = vmatprep.subr.mxu0 0.0
    %64 = vmatpush1.msra.mxu0 0.0
    %65 = vmatprep.subr.mxu0 0.0
    %66 = vmatpush1.msra.mxu0 0.0
    %67 = vmatprep.subr.mxu0 0.0
    %68 = vmatpush1.msra.mxu0 0.0
    %69 = vmatprep.subr.mxu0 0.0
    %70 = vmatpush1.msra.mxu0 0.0
    %71 = vmatprep.subr.mxu0 0.0
    %72 = vmatpush1.msra.mxu0 0.0
    %73 = vmatprep.subr.mxu0 0.0
    %74 = vmatpush1.msra.mxu0 0.0
    %75 = vmatprep.subr.mxu0 0.0
    %76 = vmatpush1.msra.mxu0 0.0
    %77 = vmatprep.subr.mxu0 0.0
    %78 = vmatpush1.msra.mxu0 0.0
    %79 = vmatprep.subr.mxu0 0.0
    %80 = vmatpush1.msra.mxu0 0.0
    %81 = vmatprep.subr.mxu0 0.0
    %82 = vmatpush1.msra.mxu0 %v45
    %83 = vmatprep.subr.mxu0 0.0
    %84 = vmatpush1.msra.mxu0 %v44
    %85 = vmatprep.subr.mxu0 0.0
    %86 = vmatpush1.msra.mxu0 %v43
    %87 = vmatprep.subr.mxu0 0.0
    %88 = vmatpush1.msra.mxu0 %v42
    %89 = vmatprep.subr.mxu0 0.0
    %90 = vmatpush2.msra.mxu0 0.0
    %91 = vmatprep.subr.mxu0 0.0
    %92 = vmatpush2.msra.mxu0 0.0
    %93 = vmatprep.subr.mxu0 0.0
    %94 = vmatpush2.msra.mxu0 0.0
    %95 = vmatprep.subr.mxu0 0.0
    %96 = vmatpush2.msra.mxu0 0.0
    %97 = vmatprep.subr.mxu0 0.0
    %98 = vmatpush2.msra.mxu0 0.0
    %99 = vmatprep.subr.mxu0 0.0
    %100 = vmatpush2.msra.mxu0 0.0
    %101 = vmatprep.subr.mxu0 0.0
    %102 = vmatpush2.msra.mxu0 0.0
    %103 = vmatprep.subr.mxu0 0.0
    %104 = vmatpush2.msra.mxu0 0.0
    %105 = vmatprep.subr.mxu0 0.0
    %106 = vmatpush2.msra.mxu0 0.0
    %107 = vmatprep.subr.mxu0 0.0
    %108 = vmatpush2.msra.mxu0 0.0
    %109 = vmatprep.subr.mxu0 0.0
    %110 = vmatpush2.msra.mxu0 0.0
    %111 = vmatprep.subr.mxu0 0.0
    %112 = vmatpush2.msra.mxu0 0.0
    %113 = vmatprep.subr.mxu0 0.0
    %114 = vmatpush2.msra.mxu0 0.0
    %115 = vmatprep.subr.mxu0 0.0
    %116 = vmatpush2.msra.mxu0 0.0
    %117 = vmatprep.subr.mxu0 0.0
    %118 = vmatpush2.msra.mxu0 0.0
    %119 = vmatprep.subr.mxu0 0.0
    %120 = vmatpush2.msra.mxu0 0.0
    %121 = vmatprep.mubr.f32.mxu0 0.0
    %122 = vmatmul.mubr.f32.gmra.mxu0 %v55
    %v123 = vpop.f32.mrf.mxu0
    %v124 = vadd.f32 %v51, %v123
    %v125 = vpop.f32.mrf.mxu0
    %126 = vdwg.mxu0
    %127 = vst [vmem:[#allocation7] sm:$0xff] %v124
    // Predicated region
    $region22: #{tpu_custom_call.1} parent=1 // pred_check
      _
    $region23: #{tpu_custom_call.1} parent=1 // pred_check_branch
      %129 = sbr.rel (0) target = $region25
    $region24: #{tpu_custom_call.1} parent=1 // pred_region
      %s131 = ssub.s32 128, 128
      %132 = vsyncadd [#allocation4], %s131
      %s134 = sshll.u32 [#allocation7], 4
      %s135 = int_to_ptr.vmem [resolvable:$true] %s134
      %137 = dma.vmem_to_hbm [thread:$0]  %s135, 128, %s3, [#allocation4]
    $region25: #{tpu_custom_call.1} parent=1 // pred_fallthru
      _
    // Predicated region
    $region26: #{tpu_custom_call.1} parent=1 // pred_check
      _
    $region27: #{tpu_custom_call.1} parent=1 // pred_check_branch
      %139 = sbr.rel (0) target = $region29
    $region28: #{tpu_custom_call.1} parent=1 // pred_region
      %140 = dma.done [#allocation4], 128
    $region29: #{tpu_custom_call.1} parent=1 // pred_fallthru
      _
    %141 = vsyncpa [#allocation3], 1
    %142 = vsyncpa [#allocation6], 1
    %143 = vsyncpa [#allocation4], 1

</llo_original>
